<compile_context>
chip_gen: v6e
topology: v6e:2x2x1
jax: 0.10.0
libtpu: 0.0.40
codegen_flags: <defaults>
</compile_context>

<pallas_src>
import jax
import jax.numpy as jnp
from jax import lax
from jax.experimental import pallas as pl
from jax.experimental.pallas import tpu as pltpu

_EPS = 1e-5  # nn.LayerNorm default eps


def _round_up(x, m):
    return (x + m - 1) // m * m


def _make_ln_kernel(apply_relu):
    def kernel(x_ref, g_ref, b_ref, o_ref):
        # x_ref: (BC_TILE, F, T_TILE) -- normalize over F (the sublane axis).
        x = x_ref[...].astype(jnp.float32)
        inv_f = 1.0 / x.shape[1]
        s1 = jnp.sum(x, axis=1, keepdims=True)          # (BC_TILE, 1, T_TILE)
        s2 = jnp.sum(x * x, axis=1, keepdims=True)      # (BC_TILE, 1, T_TILE)
        mean = s1 * inv_f
        var = jnp.maximum(s2 * inv_f - mean * mean, 0.0)  # biased var (PyTorch LN)
        inv = lax.rsqrt(var + _EPS)                     # per-column scale
        col_bias = -mean * inv                          # per-column bias
        g = g_ref[...][None]                            # (1, F, 1) float32
        b = b_ref[...][None]                            # (1, F, 1) float32
        y = (x * inv + col_bias) * g + b
        if apply_relu:
            y = jnp.maximum(y, 0.0)
        o_ref[...] = y.astype(o_ref.dtype)

    return kernel


def _choose_t_tile(T, F):
    """Lane tile along time: multiple of 128 and <= T (ragged last block handled
    by Pallas); for T < 128 use the full extent."""
    if T >= 128:
        t_tile = 128 * min(T // 128, 16)  # <= T, multiple of 128, cap 2048
        # keep a single (1, F, t_tile) f32 row <= ~4 MiB so VMEM budgets hold
        while F * t_tile * 4 > (4 << 20) and t_tile > 128:
            t_tile -= 128
        return t_tile
    return T


def cnn_layer_norm(x, gamma, beta, *, fuse_relu=False):
    """CNNLayerNorm.forward for x of shape (B, C, n_feats, T), native NCHW layout.

    Equivalent to: x.transpose(2,3) -> nn.LayerNorm(n_feats) -> transpose back.
    """
    B, C, F, T = x.shape
    BC = B * C
    itemsize = jnp.dtype(x.dtype).itemsize

    t_tile = _choose_t_tile(T, F)
    t_tiles = pl.cdiv(T, t_tile)

    # Target ~2 MiB (f32) per block by stacking several B*C rows per grid step.
    row_f32 = F * t_tile * 4
    bc_tile = max(1, min(BC, (2 << 20) // max(row_f32, 1)))
    # v7x megacore: keep >= 2 grid steps when possible so neither core idles.
    if pl.cdiv(BC, bc_tile) * t_tiles < 2 and BC >= 2:
        bc_tile = pl.cdiv(BC, 2)
    bc_tiles = pl.cdiv(BC, bc_tile)

    # Contiguous leading-dim merge is layout-free: (B, C, F, T) -> (B*C, F, T).
    x3 = x.reshape(BC, F, T)
    # Keep affine params in f32 (matches nn.LayerNorm; they are tiny).
    g2 = gamma.reshape(F, 1).astype(jnp.float32)
    b2 = beta.reshape(F, 1).astype(jnp.float32)

    # VMEM budget: double-buffered in+out blocks in x dtype, plus ~3 live f32
    # full-tile temps, plus margin.  Cap at 32 MiB (safe scoped limit on v7x's
    # 64 MiB physical VMEM; still raises v5e's 16 MiB scoped default).
    block_in = bc_tile * F * t_tile * itemsize
    block_f32 = bc_tile * row_f32
    vmem_needed = 4 * block_in + 3 * block_f32 + (2 << 20)
    vmem_limit = int(min(32 << 20, max(16 << 20, vmem_needed)))

    out3 = pl.pallas_call(
        _make_ln_kernel(fuse_relu),
        out_shape=jax.ShapeDtypeStruct((BC, F, T), x.dtype),
        grid_spec=pltpu.PrefetchScalarGridSpec(
            num_scalar_prefetch=0,
            grid=(bc_tiles, t_tiles),
            in_specs=[
                pl.BlockSpec((bc_tile, F, t_tile), lambda i, j: (i, 0, j)),  # x
                pl.BlockSpec((F, 1), lambda i, j: (0, 0)),                   # gamma
                pl.BlockSpec((F, 1), lambda i, j: (0, 0)),                   # beta
            ],
            out_specs=pl.BlockSpec((bc_tile, F, t_tile), lambda i, j: (i, 0, j)),
        ),
        compiler_params=pltpu.CompilerParams(
            dimension_semantics=("parallel", "parallel"),
            vmem_limit_bytes=vmem_limit,
        ),
    )(x3, g2, b2)

    return out3.reshape(B, C, F, T)


def _ref_ln(x, gamma, beta):
    mean = jnp.mean(x, axis=2, keepdims=True)
    var = jnp.mean((x - mean) ** 2, axis=2, keepdims=True)
    return ((x - mean) / jnp.sqrt(var + _EPS) * gamma[None, None, :, None]
            + beta[None, None, :, None])


if __name__ == "__main__":
    key = jax.random.PRNGKey(0)
    k1, k2, k3, k4 = jax.random.split(key, 4)

    # (batch, channels, n_feats, time) -- small shapes consistent with the module
    B, C, F, T = 2, 4, 16, 16
    x = jax.random.normal(k1, (B, C, F, T), dtype=jnp.float32)
    gamma = 1.0 + 0.1 * jax.random.normal(k2, (F,), dtype=jnp.float32)
    beta = 0.1 * jax.random.normal(k3, (F,), dtype=jnp.float32)

    out = jax.block_until_ready(cnn_layer_norm(x, gamma, beta))
    ref = _ref_ln(x, gamma, beta)
    assert out.shape == x.shape and out.dtype == x.dtype
    assert jnp.max(jnp.abs(out - ref)) < 1e-4

    # fused LN + ReLU path (ResidualCNN applies relu right after this LN)
    out_r = jax.block_until_ready(cnn_layer_norm(x, gamma, beta, fuse_relu=True))
    assert jnp.max(jnp.abs(out_r - jnp.maximum(ref, 0.0))) < 1e-4

    # ragged-time case (T not a multiple of 128): exercises the in-kernel
    # partial last T-block handling (no wrapper pad / slice).
    B2, C2, F2, T2 = 1, 2, 16, 200
    x2 = jax.random.normal(k4, (B2, C2, F2, T2), dtype=jnp.float32)
    g2 = jnp.ones((F2,), dtype=jnp.float32)
    b2 = jnp.zeros((F2,), dtype=jnp.float32)
    out2 = jax.block_until_ready(cnn_layer_norm(x2, g2, b2))
    ref2 = _ref_ln(x2, g2, b2)
    assert out2.shape == x2.shape
    assert jnp.max(jnp.abs(out2 - ref2)) < 1e-4

    print("KERNEL_OK")
</pallas_src>

<mosaic_0001>
module attributes {stable_mosaic.version = 11 : i64} {
  func.func @kernel(%arg0: i32, %arg1: i32, %arg2: memref<4x16x16xf32, #tpu.memory_space<vmem>>, %arg3: memref<16x1xf32, #tpu.memory_space<vmem>>, %arg4: memref<16x1xf32, #tpu.memory_space<vmem>>, %arg5: memref<4x16x16xf32, #tpu.memory_space<vmem>>) attributes {dimension_semantics = [#tpu.dimension_semantics<parallel>, #tpu.dimension_semantics<parallel>], iteration_bounds = array<i64: 2, 1>, scalar_prefetch = 0 : i64, scratch_operands = 0 : i64, tpu.core_type = #tpu.core_type<tc>, window_params = [{transform_indices = @transform_0, window_bounds = array<i64: 4, 16, 16>}, {pipeline_mode = #tpu.pipeline_mode<synchronous>, transform_indices = @transform_1, window_bounds = array<i64: 16, 1>}, {pipeline_mode = #tpu.pipeline_mode<synchronous>, transform_indices = @transform_2, window_bounds = array<i64: 16, 1>}, {transform_indices = @transform_3, window_bounds = array<i64: 4, 16, 16>}]} {
    %c0 = arith.constant 0 : index
    %c0_0 = arith.constant 0 : index
    %c0_1 = arith.constant 0 : index
    %0 = vector.load %arg2[%c0, %c0_0, %c0_1] : memref<4x16x16xf32, #tpu.memory_space<vmem>>, vector<4x16x16xf32>
    %cst = arith.constant dense<0.000000e+00> : vector<4x16xf32>
    %1 = vector.multi_reduction <add>, %0, %cst [1] : vector<4x16x16xf32> to vector<4x16xf32>
    %2 = vector.shape_cast %1 : vector<4x16xf32> to vector<4x1x16xf32>
    %3 = arith.mulf %0, %0 : vector<4x16x16xf32>
    %cst_2 = arith.constant dense<0.000000e+00> : vector<4x16xf32>
    %4 = vector.multi_reduction <add>, %3, %cst_2 [1] : vector<4x16x16xf32> to vector<4x16xf32>
    %5 = vector.shape_cast %4 : vector<4x16xf32> to vector<4x1x16xf32>
    %cst_3 = arith.constant 6.250000e-02 : f32
    %6 = vector.broadcast %cst_3 : f32 to vector<4x1x16xf32>
    %7 = arith.mulf %2, %6 : vector<4x1x16xf32>
    %cst_4 = arith.constant 6.250000e-02 : f32
    %8 = vector.broadcast %cst_4 : f32 to vector<4x1x16xf32>
    %9 = arith.mulf %5, %8 : vector<4x1x16xf32>
    %10 = arith.mulf %7, %7 : vector<4x1x16xf32>
    %11 = arith.subf %9, %10 : vector<4x1x16xf32>
    %cst_5 = arith.constant 0.000000e+00 : f32
    %12 = vector.broadcast %cst_5 : f32 to vector<4x1x16xf32>
    %13 = arith.maximumf %11, %12 : vector<4x1x16xf32>
    %cst_6 = arith.constant 9.99999974E-6 : f32
    %14 = vector.broadcast %cst_6 : f32 to vector<4x1x16xf32>
    %15 = arith.addf %13, %14 : vector<4x1x16xf32>
    %16 = math.rsqrt %15 : vector<4x1x16xf32>
    %cst_7 = arith.constant 0.000000e+00 : f32
    %17 = vector.broadcast %cst_7 : f32 to vector<4x1x16xf32>
    %18 = arith.subf %17, %7 : vector<4x1x16xf32>
    %19 = arith.mulf %18, %16 : vector<4x1x16xf32>
    %c0_8 = arith.constant 0 : index
    %c0_9 = arith.constant 0 : index
    %20 = vector.load %arg3[%c0_8, %c0_9] : memref<16x1xf32, #tpu.memory_space<vmem>>, vector<16x1xf32>
    %21 = vector.shape_cast %20 : vector<16x1xf32> to vector<1x16x1xf32>
    %c0_10 = arith.constant 0 : index
    %c0_11 = arith.constant 0 : index
    %22 = vector.load %arg4[%c0_10, %c0_11] : memref<16x1xf32, #tpu.memory_space<vmem>>, vector<16x1xf32>
    %23 = vector.shape_cast %22 : vector<16x1xf32> to vector<1x16x1xf32>
    %24 = vector.broadcast %16 : vector<4x1x16xf32> to vector<4x16x16xf32>
    %25 = arith.mulf %0, %24 : vector<4x16x16xf32>
    %26 = vector.broadcast %19 : vector<4x1x16xf32> to vector<4x16x16xf32>
    %27 = arith.addf %25, %26 : vector<4x16x16xf32>
    %28 = vector.broadcast %21 : vector<1x16x1xf32> to vector<4x16x16xf32>
    %29 = arith.mulf %27, %28 : vector<4x16x16xf32>
    %30 = vector.broadcast %23 : vector<1x16x1xf32> to vector<4x16x16xf32>
    %31 = arith.addf %29, %30 : vector<4x16x16xf32>
    %c0_12 = arith.constant 0 : index
    %c0_13 = arith.constant 0 : index
    %c0_14 = arith.constant 0 : index
    %32 = vector.load %arg5[%c0_12, %c0_13, %c0_14] : memref<4x16x16xf32, #tpu.memory_space<vmem>>, vector<4x16x16xf32>
    tpu.vector_store %arg5[%c0_12, %c0_13, %c0_14], %31 {strides = array<i32>} : memref<4x16x16xf32, #tpu.memory_space<vmem>>, vector<4x16x16xf32>,
    return
  }
  func.func @transform_0(%arg0: i32, %arg1: i32) -> (i32, i32, i32) {
    %c0_i32 = arith.constant 0 : i32
    %c0_i32_0 = arith.constant 0 : i32
    return %arg0, %c0_i32, %arg1 : i32, i32, i32
  }
  func.func @transform_1(%arg0: i32, %arg1: i32) -> (i32, i32) {
    %c0_i32 = arith.constant 0 : i32
    %c0_i32_0 = arith.constant 0 : i32
    %c0_i32_1 = arith.constant 0 : i32
    return %c0_i32, %c0_i32_0 : i32, i32
  }
  func.func @transform_2(%arg0: i32, %arg1: i32) -> (i32, i32) {
    %c0_i32 = arith.constant 0 : i32
    %c0_i32_0 = arith.constant 0 : i32
    %c0_i32_1 = arith.constant 0 : i32
    return %c0_i32, %c0_i32_0 : i32, i32
  }
  func.func @transform_3(%arg0: i32, %arg1: i32) -> (i32, i32, i32) {
    %c0_i32 = arith.constant 0 : i32
    %c0_i32_0 = arith.constant 0 : i32
    return %arg0, %c0_i32, %arg1 : i32, i32, i32
  }
}

</mosaic_0001>

<llo_original>
// kernel: tpu_custom_call.1
$region0: #{tpu_custom_call.1}
  #allocation0 [shape = 'u32[]', space=smem, size = 0x4, offset = 0x4, fixed_abs, tag = 'smem constant byte address 0x4 - core index']
  #allocation1 [shape = 'u32[144,128]{1,0:T(1,128)}', space=vmem, size = 0x12000, scoped, tag = 'internal scratch']
  %s0 = inlined_call_operand.hbm [shape: f32[8,16,16], index: 0, kind: input, shape index: {}]
  %s1 = inlined_call_operand.vmem [shape: f32[16,1], index: 1, kind: input, shape index: {}]
  %s2 = inlined_call_operand.vmem [shape: f32[16,1], index: 2, kind: input, shape index: {}]
  %s3 = inlined_call_operand.hbm [shape: f32[8,16,16], index: 3, kind: output, shape index: {}]
  %s4 = sld [smem:[#allocation0]]
  $region49: #{tpu_custom_call.1} parent=0
    _
  %s6 = ssub.s32 1, %s4
  %s7 = scalar_select 0, %s6, %s4
  $region1: #{tpu_custom_call.1} parent=0
    #allocation2 [shape = 'u8[65536]{0}', space=vmem, size = 0x10000, scoped, tag = 'input window, operand 0']
    #allocation3 [shape = 's32[2]{0}', space=sflag, size = 0x8, scoped, tag = 'scoped memory for tpu_custom_call.1']
    #allocation4 [shape = 's32[2]{0}', space=sflag, size = 0x8, scoped, tag = 'scoped memory for tpu_custom_call.1']
    #allocation5 [shape = 'u8[65536]{0}', space=vmem, size = 0x10000, scoped, tag = 'output window, operand 0']
    %8 = vsyncpa [#allocation3], 0
    %s9 = scalar_lea.sflag [#allocation3], 1
    %10 = vsyncpa %s9, 0
    %11 = vsyncpa [#allocation4], 0
    %s12 = scalar_lea.sflag [#allocation4], 1
    %13 = vsyncpa %s12, 0
    loop: start=0, step=1, limit=4
    $region2: #{tpu_custom_call.1} parent=1 // loop_pre_header
      _
    $region3: #{tpu_custom_call.1} parent=1 // loop_header
      %s15 = sphi 0, %s19
      %p16 = scmp.ge.s32.totalorder %s15, 4
      %s22 = sphi 0, %s34
      %s23 = sphi 0, %s30
      %s24 = sphi 0, %s22
      %s25 = sphi 0, %s23
      %s26 = sphi 0, %s24
      %s27 = sphi 0, %s25
      %s39 = sphi 0, %s41
      %s42 = sphi 0, %s39
      %s43 = sphi 0, %s42
      %s59 = sphi 0, %s43
      %s63 = sphi 0, %s63
      %s65 = sphi 0, %s63
      %s66 = sphi 0, %s65
      %s80 = sphi 0, %s66
      %s84 = sphi 0, %s84
      %s86 = sphi 0, %s84
      %s87 = sphi 0, %s86
      %s101 = sphi 0, %s87
      %s109 = sphi 0, %s111
      %s112 = sphi 0, %s109
      %s113 = sphi 0, %s112
      %s129 = sphi 0, %s113
    $region4: #{tpu_custom_call.1} parent=1 // loop_header_branch
      %18 = sbr.rel (%p16) target = $region8
    $region5: #{tpu_custom_call.1} parent=1 // loop_body
      %s20 = ssub.s32 %s15, 1
      %s21 = ssub.s32 %s15, 2
      %s28 = sadd.s32 1, %s23
      %p29 = scmp.ge.s32.totalorder %s28, 1
      %s30 = scalar_select %p29, 0, %s28
      %s31 = sadd.s32 1, %s22
      %s32 = scalar_select %p29, %s31, %s22
      %p33 = scmp.ge.s32.totalorder %s32, 2
      %s34 = scalar_select %p33, 0, %s32
      %s35 = ssub.s32 %s22, %s34
      %s36 = ssub.s32 %s23, %s30
      %s37 = sor.u32 %s35, %s36
      %p38 = scmp.eq.s32.totalorder %s37, 0
      %s40 = sadd.s32 %s39, 1
      %s41 = scalar_select %p38, %s39, %s40
      %p44 = pneg %p38
      %p45 = scmp.eq.s32.totalorder %s15, 1
      %p46 = por %p44, %p45
      %p47 = scmp.ne.s32.totalorder %s39, %s42
      %p48 = scmp.eq.s32.totalorder %s15, 0
      %p49 = por %p47, %p48
      %p50 = scmp.ne.s32.totalorder %s39, %s42
      %p51 = scmp.eq.s32.totalorder %s20, 1
      %p52 = por %p50, %p51
      %p53 = scmp.ne.s32.totalorder %s42, %s43
      %p54 = scmp.eq.s32.totalorder %s20, 0
      %p55 = por %p53, %p54
      %p56 = scmp.ne.s32.totalorder %s42, %s43
      %p57 = scmp.eq.s32.totalorder %s21, 1
      %p58 = por %p56, %p57
      %p60 = scmp.ne.s32.totalorder %s43, %s59
      %p61 = scmp.eq.s32.totalorder %s21, 0
      %p62 = por %p60, %p61
      %s64 = sadd.s32 %s63, 1
      %p67 = scmp.eq.s32.totalorder %s15, 1
      %p68 = scmp.ne.s32.totalorder %s63, %s65
      %p69 = scmp.eq.s32.totalorder %s15, 0
      %p70 = por %p68, %p69
      %p71 = scmp.ne.s32.totalorder %s63, %s65
      %p72 = scmp.eq.s32.totalorder %s20, 1
      %p73 = por %p71, %p72
      %p74 = scmp.ne.s32.totalorder %s65, %s66
      %p75 = scmp.eq.s32.totalorder %s20, 0
      %p76 = por %p74, %p75
      %p77 = scmp.ne.s32.totalorder %s65, %s66
      %p78 = scmp.eq.s32.totalorder %s21, 1
      %p79 = por %p77, %p78
      %p81 = scmp.ne.s32.totalorder %s66, %s80
      %p82 = scmp.eq.s32.totalorder %s21, 0
      %p83 = por %p81, %p82
      %s85 = sadd.s32 %s84, 1
      %p88 = scmp.eq.s32.totalorder %s15, 1
      %p89 = scmp.ne.s32.totalorder %s84, %s86
      %p90 = scmp.eq.s32.totalorder %s15, 0
      %p91 = por %p89, %p90
      %p92 = scmp.ne.s32.totalorder %s84, %s86
      %p93 = scmp.eq.s32.totalorder %s20, 1
      %p94 = por %p92, %p93
      %p95 = scmp.ne.s32.totalorder %s86, %s87
      %p96 = scmp.eq.s32.totalorder %s20, 0
      %p97 = por %p95, %p96
      %p98 = scmp.ne.s32.totalorder %s86, %s87
      %p99 = scmp.eq.s32.totalorder %s21, 1
      %p100 = por %p98, %p99
      %p102 = scmp.ne.s32.totalorder %s87, %s101
      %p103 = scmp.eq.s32.totalorder %s21, 0
      %p104 = por %p102, %p103
      %s105 = ssub.s32 %s22, %s34
      %s106 = ssub.s32 %s23, %s30
      %s107 = sor.u32 %s105, %s106
      %p108 = scmp.eq.s32.totalorder %s107, 0
      %s110 = sadd.s32 %s109, 1
      %s111 = scalar_select %p108, %s109, %s110
      %p114 = pneg %p108
      %p115 = scmp.eq.s32.totalorder %s15, 1
      %p116 = por %p114, %p115
      %p117 = scmp.ne.s32.totalorder %s109, %s112
      %p118 = scmp.eq.s32.totalorder %s15, 0
      %p119 = por %p117, %p118
      %p120 = scmp.ne.s32.totalorder %s109, %s112
      %p121 = scmp.eq.s32.totalorder %s20, 1
      %p122 = por %p120, %p121
      %p123 = scmp.ne.s32.totalorder %s112, %s113
      %p124 = scmp.eq.s32.totalorder %s20, 0
      %p125 = por %p123, %p124
      %p126 = scmp.ne.s32.totalorder %s112, %s113
      %p127 = scmp.eq.s32.totalorder %s21, 1
      %p128 = por %p126, %p127
      %p130 = scmp.ne.s32.totalorder %s113, %s129
      %p131 = scmp.eq.s32.totalorder %s21, 0
      %p132 = por %p130, %p131
      %p133 = scmp.le.s32.totalorder 1, %s15
      %p134 = scmp.lt.s32.totalorder %s15, 3
      %p135 = pnand %p133, %p134
      %p136 = pneg %p135
      // Predicated region
      $region9: #{tpu_custom_call.1} parent=5 // pred_check
        _
      $region10: #{tpu_custom_call.1} parent=5 // pred_check_branch
        %138 = sbr.rel (%p135) target = $region12
      $region11: #{tpu_custom_call.1} parent=5 // pred_region
        %s139 = ssub.s32 %s15, 1
        // Predicated region
        $region13: #{tpu_custom_call.1} parent=11 // pred_check
          %p140 = pneg %p76
        $region14: #{tpu_custom_call.1} parent=11 // pred_check_branch
          %142 = sbr.rel (%p140) target = $region16
        $region15: #{tpu_custom_call.1} parent=11 // pred_region
          _
        $region16: #{tpu_custom_call.1} parent=11 // pred_fallthru
          _
        // Predicated region
        $region17: #{tpu_custom_call.1} parent=11 // pred_check
          %p143 = pneg %p97
        $region18: #{tpu_custom_call.1} parent=11 // pred_check_branch
          %145 = sbr.rel (%p143) target = $region20
        $region19: #{tpu_custom_call.1} parent=11 // pred_region
          _
        $region20: #{tpu_custom_call.1} parent=11 // pred_fallthru
          _
      $region12: #{tpu_custom_call.1} parent=5 // pred_fallthru
        _
      %p146 = scmp.lt.s32.totalorder %s15, 2
      // Predicated region
      $region21: #{tpu_custom_call.1} parent=5 // pred_check
        %p147 = pneg %p146
      $region22: #{tpu_custom_call.1} parent=5 // pred_check_branch
        %149 = sbr.rel (%p147) target = $region24
      $region23: #{tpu_custom_call.1} parent=5 // pred_region
        // Predicated region
        $region25: #{tpu_custom_call.1} parent=23 // pred_check
          %p150 = pneg %p49
        $region26: #{tpu_custom_call.1} parent=23 // pred_check_branch
          %152 = sbr.rel (%p150) target = $region28
        $region27: #{tpu_custom_call.1} parent=23 // pred_region
          %s153 = sand.u32 %s39, 1
          %s154 = scalar_lea.sflag [#allocation3], %s153
          %s155 = sand.u32 %s39, 1
          %s156 = smul.addr %s155, 64
          %s157 = scalar_lea.vmem [#allocation2], %s156
          %s158 = smul.u32 4, %s22
          %s160 = ssub.s32 1024, 1024
          %161 = vsyncadd %s154, %s160
          %s162 = smul.addr %s158, 2
          %s163 = sadd.s32 %s23, %s162
          %s164 = smul.addr %s163, 128
          %s165 = scalar_lea.hbm %s0, %s164
          %s166 = sshll.u32 %s157, 4
          %s167 = int_to_ptr.vmem [resolvable:$true] %s166
          %172 = dma.hbm_to_vmem [thread:$0]  %s165, 1024, %s167, %s154, 128, 128, 8
        $region28: #{tpu_custom_call.1} parent=23 // pred_fallthru
          _
      $region24: #{tpu_custom_call.1} parent=5 // pred_fallthru
        _
      %p173 = scmp.le.s32.totalorder 1, %s15
      %p174 = scmp.lt.s32.totalorder %s15, 3
      %p175 = pnand %p173, %p174
      %p176 = pneg %p175
      // Predicated region
      $region29: #{tpu_custom_call.1} parent=5 // pred_check
        _
      $region30: #{tpu_custom_call.1} parent=5 // pred_check_branch
        %178 = sbr.rel (%p175) target = $region32
      $region31: #{tpu_custom_call.1} parent=5 // pred_region
        %s179 = ssub.s32 %s15, 1
        %s180 = sand.u32 %s42, 1
        %s181 = scalar_lea.sflag [#allocation3], %s180
        %s182 = sand.u32 %s42, 1
        %s183 = smul.addr %s182, 64
        %s184 = scalar_lea.vmem [#allocation2], %s183
        // Predicated region
        $region33: #{tpu_custom_call.1} parent=31 // pred_check
          %p185 = pneg %p55
        $region34: #{tpu_custom_call.1} parent=31 // pred_check_branch
          %187 = sbr.rel (%p185) target = $region36
        $region35: #{tpu_custom_call.1} parent=31 // pred_region
          %188 = dma.done %s181, 1024
        $region36: #{tpu_custom_call.1} parent=31 // pred_fallthru
          _
        %s189 = sand.u32 %s42, 1
        %s190 = scalar_lea.sflag [#allocation3], %s189
        %s191 = sand.u32 %s42, 1
        %s192 = smul.addr %s191, 64
        %s193 = scalar_lea.vmem [#allocation2], %s192
        %p194 = pneg %p55
        %p195 = pneg %p52
        %p196 = pneg %p76
        %p197 = pneg %p73
        %p198 = pneg %p97
        %p199 = pneg %p94
        %p200 = pneg %p125
        %p201 = pneg %p122
        %s202 = sand.u32 %s112, 1
        %s203 = scalar_lea.sflag [#allocation4], %s202
        %s204 = sand.u32 %s112, 1
        %s205 = smul.addr %s204, 64
        %s206 = scalar_lea.vmem [#allocation5], %s205
        %s207 = smul.u32 4, %s24
        %s208 = smul.u32 4, %s24
        %v209 = vld [vmem:[%s184] sm:$0xff]
        %v210 = vld [vmem:[%s184 + $0x8] sm:$0xff]
        %v211 = vld [vmem:[%s184 + $0x10] sm:$0xff]
        %v212 = vld [vmem:[%s184 + $0x18] sm:$0xff]
        %v213 = vld [vmem:[%s184 + $0x20] sm:$0xff]
        %v214 = vld [vmem:[%s184 + $0x28] sm:$0xff]
        %v215 = vld [vmem:[%s184 + $0x30] sm:$0xff]
        %v216 = vld [vmem:[%s184 + $0x38] sm:$0xff]
        %vm217 = vcmask 130048
        %v218 = vsel %vm217, %v209, 0.0
        %v219 = vsel %vm217, %v210, 0.0
        %v220 = vadd.f32 %v218, %v219
        %v221 = vrot.slane %v220, 4
        %v222 = vadd.f32 %v220, %v221
        %v223 = vrot.slane %v222, 2
        %v224 = vadd.f32 %v222, %v223
        %v225 = vrot.slane %v224, 1
        %v226 = vadd.f32 %v224, %v225
        %v227 = vsel %vm217, %v211, 0.0
        %v228 = vsel %vm217, %v212, 0.0
        %v229 = vadd.f32 %v227, %v228
        %v230 = vrot.slane %v229, 4
        %v231 = vadd.f32 %v229, %v230
        %v232 = vrot.slane %v231, 2
        %v233 = vadd.f32 %v231, %v232
        %v234 = vrot.slane %v233, 1
        %v235 = vadd.f32 %v233, %v234
        %v236 = vsel %vm217, %v213, 0.0
        %v237 = vsel %vm217, %v214, 0.0
        %v238 = vadd.f32 %v236, %v237
        %v239 = vrot.slane %v238, 4
        %v240 = vadd.f32 %v238, %v239
        %v241 = vrot.slane %v240, 2
        %v242 = vadd.f32 %v240, %v241
        %v243 = vrot.slane %v242, 1
        %v244 = vadd.f32 %v242, %v243
        %v245 = vsel %vm217, %v215, 0.0
        %v246 = vsel %vm217, %v216, 0.0
        %v247 = vadd.f32 %v245, %v246
        %v248 = vrot.slane %v247, 4
        %v249 = vadd.f32 %v247, %v248
        %v250 = vrot.slane %v249, 2
        %v251 = vadd.f32 %v249, %v250
        %v252 = vrot.slane %v251, 1
        %v253 = vadd.f32 %v251, %v252
        %v254 = vmul.f32 %v209, %v209
        %v255 = vmul.f32 %v210, %v210
        %v256 = vmul.f32 %v211, %v211
        %v257 = vmul.f32 %v212, %v212
        %v258 = vmul.f32 %v213, %v213
        %v259 = vmul.f32 %v214, %v214
        %v260 = vmul.f32 %v215, %v215
        %v261 = vmul.f32 %v216, %v216
        %v262 = vsel %vm217, %v254, 0.0
        %v263 = vsel %vm217, %v255, 0.0
        %v264 = vadd.f32 %v262, %v263
        %v265 = vrot.slane %v264, 4
        %v266 = vadd.f32 %v264, %v265
        %v267 = vrot.slane %v266, 2
        %v268 = vadd.f32 %v266, %v267
        %v269 = vrot.slane %v268, 1
        %v270 = vadd.f32 %v268, %v269
        %v271 = vsel %vm217, %v256, 0.0
        %v272 = vsel %vm217, %v257, 0.0
        %v273 = vadd.f32 %v271, %v272
        %v274 = vrot.slane %v273, 4
        %v275 = vadd.f32 %v273, %v274
        %v276 = vrot.slane %v275, 2
        %v277 = vadd.f32 %v275, %v276
        %v278 = vrot.slane %v277, 1
        %v279 = vadd.f32 %v277, %v278
        %v280 = vsel %vm217, %v258, 0.0
        %v281 = vsel %vm217, %v259, 0.0
        %v282 = vadd.f32 %v280, %v281
        %v283 = vrot.slane %v282, 4
        %v284 = vadd.f32 %v282, %v283
        %v285 = vrot.slane %v284, 2
        %v286 = vadd.f32 %v284, %v285
        %v287 = vrot.slane %v286, 1
        %v288 = vadd.f32 %v286, %v287
        %v289 = vsel %vm217, %v260, 0.0
        %v290 = vsel %vm217, %v261, 0.0
        %v291 = vadd.f32 %v289, %v290
        %v292 = vrot.slane %v291, 4
        %v293 = vadd.f32 %v291, %v292
        %v294 = vrot.slane %v293, 2
        %v295 = vadd.f32 %v293, %v294
        %v296 = vrot.slane %v295, 1
        %v297 = vadd.f32 %v295, %v296
        %v298 = vmul.f32 %v226, 0.0625
        %v299 = vmul.f32 %v235, 0.0625
        %v300 = vmul.f32 %v244, 0.0625
        %v301 = vmul.f32 %v253, 0.0625
        %v302 = vmul.f32 %v270, 0.0625
        %v303 = vmul.f32 %v279, 0.0625
        %v304 = vmul.f32 %v288, 0.0625
        %v305 = vmul.f32 %v297, 0.0625
        %v306 = vmul.f32 %v298, %v298
        %v307 = vmul.f32 %v299, %v299
        %v308 = vmul.f32 %v300, %v300
        %v309 = vmul.f32 %v301, %v301
        %v310 = vsub.f32 %v302, %v306
        %v311 = vsub.f32 %v303, %v307
        %v312 = vsub.f32 %v304, %v308
        %v313 = vsub.f32 %v305, %v309
        %v314 = vmax.f32 %v310, 0.0
        %v315 = vmax.f32 %v311, 0.0
        %v316 = vmax.f32 %v312, 0.0
        %v317 = vmax.f32 %v313, 0.0
        %v318 = vadd.f32 %v314, 1e-05
        %v319 = vadd.f32 %v315, 1e-05
        %v320 = vadd.f32 %v316, 1e-05
        %v321 = vadd.f32 %v317, 1e-05
        %v322 = vrsqrt.pop %v318
        %v323 = vrsqrt.pop %v319
        %v324 = vrsqrt.pop %v320
        %v325 = vrsqrt.pop %v321
        %v326 = vsub.f32 0.0, %v298
        %v327 = vsub.f32 0.0, %v299
        %v328 = vsub.f32 0.0, %v300
        %v329 = vsub.f32 0.0, %v301
        %v330 = vmul.f32 %v326, %v322
        %v331 = vmul.f32 %v327, %v323
        %v332 = vmul.f32 %v328, %v324
        %v333 = vmul.f32 %v329, %v325
        %v334 = vld [vmem:[%s1] sm:$0xff]
        %v335 = vld [vmem:[%s1 + $0x8] sm:$0xff]
        %v336 = vld [vmem:[%s2] sm:$0xff]
        %v337 = vld [vmem:[%s2 + $0x8] sm:$0xff]
        %v338 = vmul.f32 %v209, %v322
        %v339 = vmul.f32 %v210, %v322
        %v340 = vmul.f32 %v211, %v323
        %v341 = vmul.f32 %v212, %v323
        %v342 = vmul.f32 %v213, %v324
        %v343 = vmul.f32 %v214, %v324
        %v344 = vmul.f32 %v215, %v325
        %v345 = vmul.f32 %v216, %v325
        %v346 = vadd.f32 %v338, %v330
        %v347 = vadd.f32 %v339, %v330
        %v348 = vadd.f32 %v340, %v331
        %v349 = vadd.f32 %v341, %v331
        %v350 = vadd.f32 %v342, %v332
        %v351 = vadd.f32 %v343, %v332
        %v352 = vadd.f32 %v344, %v333
        %v353 = vadd.f32 %v345, %v333
        %355 = vset.pattern.permute.xlu0 0
        %356 = vperm.xlu0 %355, %v334
        %v357 = vpop.permute.xlu0 %356
        %360 = vset.pattern.permute.xlu0 0
        %361 = vperm.xlu0 %360, %v335
        %v362 = vpop.permute.xlu0 %361
        %v364 = vmul.f32 %v346, %v357
        %v365 = vmul.f32 %v347, %v362
        %v366 = vmul.f32 %v348, %v357
        %v367 = vmul.f32 %v349, %v362
        %v368 = vmul.f32 %v350, %v357
        %v369 = vmul.f32 %v351, %v362
        %v370 = vmul.f32 %v352, %v357
        %v371 = vmul.f32 %v353, %v362
        %373 = vset.pattern.permute.xlu0 0
        %374 = vperm.xlu0 %373, %v336
        %v375 = vpop.permute.xlu0 %374
        %378 = vset.pattern.permute.xlu0 0
        %379 = vperm.xlu0 %378, %v337
        %v380 = vpop.permute.xlu0 %379
        %v382 = vadd.f32 %v364, %v375
        %v383 = vadd.f32 %v365, %v380
        %v384 = vadd.f32 %v366, %v375
        %v385 = vadd.f32 %v367, %v380
        %v386 = vadd.f32 %v368, %v375
        %v387 = vadd.f32 %v369, %v380
        %v388 = vadd.f32 %v370, %v375
        %v389 = vadd.f32 %v371, %v380
        %390 = vst.msk [vmem:[%s206] sm:$0xff] %vm217, %v382
        %391 = vst.msk [vmem:[%s206 + $0x8] sm:$0xff] %vm217, %v383
        %392 = vst.msk [vmem:[%s206 + $0x10] sm:$0xff] %vm217, %v384
        %393 = vst.msk [vmem:[%s206 + $0x18] sm:$0xff] %vm217, %v385
        %394 = vst.msk [vmem:[%s206 + $0x20] sm:$0xff] %vm217, %v386
        %395 = vst.msk [vmem:[%s206 + $0x28] sm:$0xff] %vm217, %v387
        %396 = vst.msk [vmem:[%s206 + $0x30] sm:$0xff] %vm217, %v388
        %397 = vst.msk [vmem:[%s206 + $0x38] sm:$0xff] %vm217, %v389
        %s398 = sand.u32 %s112, 1
        %s399 = scalar_lea.sflag [#allocation4], %s398
        %s400 = sand.u32 %s112, 1
        %s401 = smul.addr %s400, 64
        %s402 = scalar_lea.vmem [#allocation5], %s401
        // Predicated region
        $region37: #{tpu_custom_call.1} parent=31 // pred_check
          %p403 = pneg %p122
        $region38: #{tpu_custom_call.1} parent=31 // pred_check_branch
          %405 = sbr.rel (%p403) target = $region40
        $region39: #{tpu_custom_call.1} parent=31 // pred_region
          %s406 = smul.u32 4, %s24
          %s408 = ssub.s32 1024, 1024
          %409 = vsyncadd %s399, %s408
          %s410 = smul.addr %s406, 2
          %s411 = sadd.s32 %s25, %s410
          %s412 = smul.addr %s411, 128
          %s413 = scalar_lea.hbm %s3, %s412
          %s414 = sshll.u32 %s402, 4
          %s415 = int_to_ptr.vmem [resolvable:$true] %s414
          %420 = dma.vmem_to_hbm [thread:$0]  %s415, 1024, %s413, %s399, 128, 128, 8
        $region40: #{tpu_custom_call.1} parent=31 // pred_fallthru
          _
      $region32: #{tpu_custom_call.1} parent=5 // pred_fallthru
        _
      %p421 = scmp.le.s32.totalorder 2, %s15
      // Predicated region
      $region41: #{tpu_custom_call.1} parent=5 // pred_check
        %p422 = pneg %p421
      $region42: #{tpu_custom_call.1} parent=5 // pred_check_branch
        %424 = sbr.rel (%p422) target = $region44
      $region43: #{tpu_custom_call.1} parent=5 // pred_region
        %s425 = ssub.s32 %s15, 2
        // Predicated region
        $region45: #{tpu_custom_call.1} parent=43 // pred_check
          %p426 = pneg %p128
        $region46: #{tpu_custom_call.1} parent=43 // pred_check_branch
          %428 = sbr.rel (%p426) target = $region48
        $region47: #{tpu_custom_call.1} parent=43 // pred_region
          %s429 = sand.u32 %s113, 1
          %s430 = scalar_lea.sflag [#allocation4], %s429
          %s431 = sand.u32 %s113, 1
          %s432 = smul.addr %s431, 64
          %s433 = scalar_lea.vmem [#allocation5], %s432
          %434 = dma.done %s430, 1024
        $region48: #{tpu_custom_call.1} parent=43 // pred_fallthru
          _
      $region44: #{tpu_custom_call.1} parent=5 // pred_fallthru
        _
    $region6: #{tpu_custom_call.1} parent=1 // loop_footer
      %s19 = sadd.s32 1, %s15
    $region7: #{tpu_custom_call.1} parent=1 // loop_footer_branch
      %14 = sbr.rel target = $region3
    $region8: #{tpu_custom_call.1} parent=1 // loop_exit
      _
    %435 = vsyncpa [#allocation3], 1
    %s436 = scalar_lea.sflag [#allocation3], 1
    %437 = vsyncpa %s436, 1
    %438 = vsyncpa [#allocation4], 1
    %s439 = scalar_lea.sflag [#allocation4], 1
    %440 = vsyncpa %s439, 1

</llo_original>
